<compile_context>
chip_gen: v6e
topology: v6e:2x2x1
jax: 0.10.0
libtpu: 0.0.40
codegen_flags: <defaults>
</compile_context>

<pallas_src>
import jax
import jax.numpy as jnp
from jax.experimental import pallas as pl
from jax.experimental.pallas import tpu as pltpu


def _actor_continuous_kernel(x_ref, w1_ref, b1_ref, w2_ref, b2_ref,
                             w3_ref, b3_ref, mean_ref):
    x = x_ref[...]                                                    # [B, S]
    h1 = jnp.tanh(
        jnp.dot(x, w1_ref[...], preferred_element_type=jnp.float32)
        + b1_ref[...])                                                # [B, H]
    h2 = jnp.tanh(
        jnp.dot(h1, w2_ref[...], preferred_element_type=jnp.float32)
        + b2_ref[...])                                                # [B, H]
    z = (jnp.dot(h2, w3_ref[...], preferred_element_type=jnp.float32)
         + b3_ref[...])                                               # [B, A]
    mean_ref[...] = jax.nn.sigmoid(z).astype(mean_ref.dtype)


def _forward_small(state, w1, b1, w2, b2, w3, b3):
    """No grid, no pipelining: everything is one VMEM-resident block."""
    B = state.shape[0]
    A = w3.shape[1]
    vmem = pl.BlockSpec(memory_space=pltpu.MemorySpace.VMEM)
    return pl.pallas_call(
        _actor_continuous_kernel,
        in_specs=[vmem] * 7,
        out_specs=vmem,
        out_shape=jax.ShapeDtypeStruct((B, A), jnp.float32),
    )(state, w1, b1, w2, b2, w3, b3)


def _forward_batched(state, w1, b1, w2, b2, w3, b3, batch_tile):
    """Tile the batch axis; weights stay resident; batch axis is 'parallel'."""
    B, S = state.shape
    A = w3.shape[1]
    n_tiles = pl.cdiv(B, batch_tile)
    Bp = n_tiles * batch_tile
    if Bp != B:
        state = jnp.pad(state, ((0, Bp - B), (0, 0)))

    full = lambda arr: pl.BlockSpec(arr.shape, lambda i: (0,) * arr.ndim)
    mean = pl.pallas_call(
        _actor_continuous_kernel,
        grid=(n_tiles,),
        in_specs=[pl.BlockSpec((batch_tile, S), lambda i: (i, 0)),
                  full(w1), full(b1), full(w2), full(b2), full(w3), full(b3)],
        out_specs=pl.BlockSpec((batch_tile, A), lambda i: (i, 0)),
        out_shape=jax.ShapeDtypeStruct((Bp, A), jnp.float32),
        compiler_params=pltpu.CompilerParams(
            dimension_semantics=("parallel",),        # shard over v7x's 2 TCs
            vmem_limit_bytes=64 * 1024 * 1024),
    )(state, w1, b1, w2, b2, w3, b3)
    return mean[:B]


def ppo_single_forward(state, params, *, batch_tile=512):
    """state: [B, state_dim] f32. params: dict of pre-transposed weights/biases.

    Returns (mean, log_std) matching PPO_single.forward; log_std is zeros
    (module semantics) and is produced in the wrapper, not the kernel.
    """
    w1, b1, w2, b2, w3, b3 = (params["w1"], params["b1"], params["w2"],
                              params["b2"], params["w3"], params["b3"])
    B = state.shape[0]
    if B <= batch_tile:
        mean = _forward_small(state, w1, b1, w2, b2, w3, b3)
    else:
        mean = _forward_batched(state, w1, b1, w2, b2, w3, b3, batch_tile)
    log_std = jnp.zeros_like(mean)
    return mean, log_std


def init_params(key, state_dim, hidden_dim, continuous_action_dim):
    """Deterministic init mimicking nn.Linear's U(-1/sqrt(in), 1/sqrt(in))."""
    ks = jax.random.split(key, 6)

    def lin(kw, kb, fan_in, fan_out):
        bound = 1.0 / jnp.sqrt(fan_in)
        # stored as [in, out] (transpose of PyTorch's [out, in])
        w = jax.random.uniform(kw, (fan_in, fan_out), jnp.float32, -bound, bound)
        b = jax.random.uniform(kb, (1, fan_out), jnp.float32, -bound, bound)
        return w, b

    w1, b1 = lin(ks[0], ks[1], state_dim, hidden_dim)
    w2, b2 = lin(ks[2], ks[3], hidden_dim, hidden_dim)
    w3, b3 = lin(ks[4], ks[5], hidden_dim, continuous_action_dim)
    return {"w1": w1, "b1": b1, "w2": w2, "b2": b2, "w3": w3, "b3": b3}


def reference_forward(state, p):
    h1 = jnp.tanh(state @ p["w1"] + p["b1"])
    h2 = jnp.tanh(h1 @ p["w2"] + p["b2"])
    mean = jax.nn.sigmoid(h2 @ p["w3"] + p["b3"])
    return mean, jnp.zeros_like(mean)


if __name__ == "__main__":
    state_dim = 8
    hidden_dim = 32
    continuous_action_dim = 4
    batch = 2

    key = jax.random.PRNGKey(0)
    k_state, k_params, k_big = jax.random.split(key, 3)

    params = init_params(k_params, state_dim, hidden_dim, continuous_action_dim)

    # --- small-batch path (no grid, whole-array VMEM refs) ---------------
    state = jax.random.normal(k_state, (batch, state_dim), dtype=jnp.float32)
    mean, log_std = jax.block_until_ready(ppo_single_forward(state, params))
    ref_mean, ref_log_std = reference_forward(state, params)
    assert mean.shape == (batch, continuous_action_dim)
    assert log_std.shape == (batch, continuous_action_dim)
    assert jnp.allclose(mean, ref_mean, atol=1e-5, rtol=1e-5)
    assert jnp.allclose(log_std, ref_log_std)

    # --- batched path (grid over batch, "parallel", padded tail) ---------
    big_batch = 1280  # not a multiple of 512 -> exercises padding + 3-tile grid
    big_state = jax.random.normal(k_big, (big_batch, state_dim), dtype=jnp.float32)
    big_mean, big_log_std = jax.block_until_ready(
        ppo_single_forward(big_state, params, batch_tile=512))
    big_ref_mean, _ = reference_forward(big_state, params)
    assert big_mean.shape == (big_batch, continuous_action_dim)
    assert jnp.allclose(big_mean, big_ref_mean, atol=1e-5, rtol=1e-5)
    assert jnp.all(big_log_std == 0.0)

    print("KERNEL_OK")
</pallas_src>

<mosaic_0001>
module attributes {stable_mosaic.version = 11 : i64} {
  func.func @_actor_continuous_kernel(%arg0: memref<2x8xf32, #tpu.memory_space<vmem>>, %arg1: memref<8x32xf32, #tpu.memory_space<vmem>>, %arg2: memref<1x32xf32, #tpu.memory_space<vmem>>, %arg3: memref<32x32xf32, #tpu.memory_space<vmem>>, %arg4: memref<1x32xf32, #tpu.memory_space<vmem>>, %arg5: memref<32x4xf32, #tpu.memory_space<vmem>>, %arg6: memref<1x4xf32, #tpu.memory_space<vmem>>, %arg7: memref<2x4xf32, #tpu.memory_space<vmem>>) attributes {dimension_semantics = [], scalar_prefetch = 0 : i64, scratch_operands = 0 : i64, tpu.core_type = #tpu.core_type<tc>} {
    %c0 = arith.constant 0 : index
    %c0_0 = arith.constant 0 : index
    %0 = vector.load %arg0[%c0, %c0_0] : memref<2x8xf32, #tpu.memory_space<vmem>>, vector<2x8xf32>
    %c0_1 = arith.constant 0 : index
    %c0_2 = arith.constant 0 : index
    %1 = vector.load %arg1[%c0_1, %c0_2] : memref<8x32xf32, #tpu.memory_space<vmem>>, vector<8x32xf32>
    %cst = arith.constant dense<0.000000e+00> : vector<2x32xf32>
    %2 = tpu.matmul %0, %1, %cst {dimension_numbers = #tpu.dot_dimension_numbers<[1], [0], [0], [1], [0, 0, 1, 1], [], []>} : vector<2x8xf32>, vector<8x32xf32>, vector<2x32xf32> -> vector<2x32xf32>
    %c0_3 = arith.constant 0 : index
    %c0_4 = arith.constant 0 : index
    %3 = vector.load %arg2[%c0_3, %c0_4] : memref<1x32xf32, #tpu.memory_space<vmem>>, vector<1x32xf32>
    %4 = vector.broadcast %3 : vector<1x32xf32> to vector<2x32xf32>
    %5 = arith.addf %2, %4 : vector<2x32xf32>
    %6 = math.tanh %5 : vector<2x32xf32>
    %c0_5 = arith.constant 0 : index
    %c0_6 = arith.constant 0 : index
    %7 = vector.load %arg3[%c0_5, %c0_6] : memref<32x32xf32, #tpu.memory_space<vmem>>, vector<32x32xf32>
    %cst_7 = arith.constant dense<0.000000e+00> : vector<2x32xf32>
    %8 = tpu.matmul %6, %7, %cst_7 {dimension_numbers = #tpu.dot_dimension_numbers<[1], [0], [0], [1], [0, 0, 1, 1], [], []>} : vector<2x32xf32>, vector<32x32xf32>, vector<2x32xf32> -> vector<2x32xf32>
    %c0_8 = arith.constant 0 : index
    %c0_9 = arith.constant 0 : index
    %9 = vector.load %arg4[%c0_8, %c0_9] : memref<1x32xf32, #tpu.memory_space<vmem>>, vector<1x32xf32>
    %10 = vector.broadcast %9 : vector<1x32xf32> to vector<2x32xf32>
    %11 = arith.addf %8, %10 : vector<2x32xf32>
    %12 = math.tanh %11 : vector<2x32xf32>
    %c0_10 = arith.constant 0 : index
    %c0_11 = arith.constant 0 : index
    %13 = vector.load %arg5[%c0_10, %c0_11] : memref<32x4xf32, #tpu.memory_space<vmem>>, vector<32x4xf32>
    %cst_12 = arith.constant dense<0.000000e+00> : vector<2x4xf32>
    %14 = tpu.matmul %12, %13, %cst_12 {dimension_numbers = #tpu.dot_dimension_numbers<[1], [0], [0], [1], [0, 0, 1, 1], [], []>} : vector<2x32xf32>, vector<32x4xf32>, vector<2x4xf32> -> vector<2x4xf32>
    %c0_13 = arith.constant 0 : index
    %c0_14 = arith.constant 0 : index
    %15 = vector.load %arg6[%c0_13, %c0_14] : memref<1x4xf32, #tpu.memory_space<vmem>>, vector<1x4xf32>
    %16 = vector.broadcast %15 : vector<1x4xf32> to vector<2x4xf32>
    %17 = arith.addf %14, %16 : vector<2x4xf32>
    %18 = arith.negf %17 : vector<2x4xf32>
    %19 = math.exp %18 : vector<2x4xf32>
    %cst_15 = arith.constant 1.000000e+00 : f32
    %20 = vector.broadcast %cst_15 : f32 to vector<2x4xf32>
    %21 = arith.addf %20, %19 : vector<2x4xf32>
    %22 = arith.divf %20, %21 : vector<2x4xf32>
    %c0_16 = arith.constant 0 : index
    %c0_17 = arith.constant 0 : index
    %23 = vector.load %arg7[%c0_16, %c0_17] : memref<2x4xf32, #tpu.memory_space<vmem>>, vector<2x4xf32>
    tpu.vector_store %arg7[%c0_16, %c0_17], %22 {strides = array<i32>} : memref<2x4xf32, #tpu.memory_space<vmem>>, vector<2x4xf32>,
    return
  }
}

</mosaic_0001>

<llo_original>
// kernel: tpu_custom_call.1
$region0: #{tpu_custom_call.1}
  #allocation0 [shape = 'u32[]', space=smem, size = 0x4, offset = 0x4, fixed_abs, tag = 'smem constant byte address 0x4 - core index']
  #allocation1 [shape = 'u32[144,128]{1,0:T(1,128)}', space=vmem, size = 0x12000, scoped, tag = 'internal scratch']
  %s0 = inlined_call_operand.hbm [shape: f32[2,8], index: 0, kind: input, shape index: {}]
  %s1 = inlined_call_operand.vmem [shape: f32[8,32], index: 1, kind: input, shape index: {}]
  %s2 = inlined_call_operand.vmem [shape: f32[1,32], index: 2, kind: input, shape index: {}]
  %s3 = inlined_call_operand.vmem [shape: f32[32,32], index: 3, kind: input, shape index: {}]
  %s4 = inlined_call_operand.hbm [shape: f32[1,32], index: 4, kind: input, shape index: {}]
  %s5 = inlined_call_operand.vmem [shape: f32[32,4], index: 5, kind: input, shape index: {}]
  %s6 = inlined_call_operand.vmem [shape: f32[1,4], index: 6, kind: input, shape index: {}]
  %s7 = inlined_call_operand.hbm [shape: f32[2,4], index: 7, kind: output, shape index: {}]
  %s8 = sld [smem:[#allocation0]]
  $region46: #{tpu_custom_call.1} parent=0
    _
  %s10 = ssub.s32 1, %s8
  %s11 = scalar_select 0, %s10, %s8
  $region1: #{tpu_custom_call.1} parent=0
    #allocation2 [shape = 'u8[1024]{0}', space=vmem, size = 0x400, scoped, tag = 'input window, operand 0, single buffered']
    #allocation3 [shape = 's32[1]{0}', space=sflag, size = 0x4, scoped, tag = 'scoped memory for tpu_custom_call.1']
    #allocation4 [shape = 's32[1]{0}', space=sflag, size = 0x4, scoped, tag = 'scoped memory for tpu_custom_call.1']
    #allocation5 [shape = 'u8[512]{0}', space=vmem, size = 0x400, scoped, tag = 'input window, operand 4, single buffered']
    #allocation6 [shape = 's32[1]{0}', space=sflag, size = 0x4, scoped, tag = 'scoped memory for tpu_custom_call.1']
    #allocation7 [shape = 'u8[1024]{0}', space=vmem, size = 0x400, scoped, tag = 'output window, operand 0, single buffered']
    %12 = vsyncpa [#allocation3], 0
    %13 = vsyncpa [#allocation6], 0
    %14 = vsyncpa [#allocation4], 0
    // Predicated region
    $region2: #{tpu_custom_call.1} parent=1 // pred_check
      _
    $region3: #{tpu_custom_call.1} parent=1 // pred_check_branch
      %16 = sbr.rel (0) target = $region5
    $region4: #{tpu_custom_call.1} parent=1 // pred_region
      %s18 = ssub.s32 32, 32
      %19 = vsyncadd [#allocation3], %s18
      %s21 = sshll.u32 [#allocation2], 4
      %s22 = int_to_ptr.vmem [resolvable:$true] %s21
      %24 = dma.hbm_to_vmem [thread:$0]  %s0, 32, %s22, [#allocation3]
    $region5: #{tpu_custom_call.1} parent=1 // pred_fallthru
      _
    // Predicated region
    $region6: #{tpu_custom_call.1} parent=1 // pred_check
      _
    $region7: #{tpu_custom_call.1} parent=1 // pred_check_branch
      %26 = sbr.rel (0) target = $region9
    $region8: #{tpu_custom_call.1} parent=1 // pred_region
      _
    $region9: #{tpu_custom_call.1} parent=1 // pred_fallthru
      _
    // Predicated region
    $region10: #{tpu_custom_call.1} parent=1 // pred_check
      _
    $region11: #{tpu_custom_call.1} parent=1 // pred_check_branch
      %28 = sbr.rel (0) target = $region13
    $region12: #{tpu_custom_call.1} parent=1 // pred_region
      _
    $region13: #{tpu_custom_call.1} parent=1 // pred_fallthru
      _
    // Predicated region
    $region14: #{tpu_custom_call.1} parent=1 // pred_check
      _
    $region15: #{tpu_custom_call.1} parent=1 // pred_check_branch
      %30 = sbr.rel (0) target = $region17
    $region16: #{tpu_custom_call.1} parent=1 // pred_region
      _
    $region17: #{tpu_custom_call.1} parent=1 // pred_fallthru
      _
    // Predicated region
    $region18: #{tpu_custom_call.1} parent=1 // pred_check
      _
    $region19: #{tpu_custom_call.1} parent=1 // pred_check_branch
      %32 = sbr.rel (0) target = $region21
    $region20: #{tpu_custom_call.1} parent=1 // pred_region
      %s34 = ssub.s32 16, 16
      %35 = vsyncadd [#allocation6], %s34
      %s37 = sshll.u32 [#allocation5], 4
      %s38 = int_to_ptr.vmem [resolvable:$true] %s37
      %40 = dma.hbm_to_vmem [thread:$0]  %s4, 16, %s38, [#allocation6]
    $region21: #{tpu_custom_call.1} parent=1 // pred_fallthru
      _
    // Predicated region
    $region22: #{tpu_custom_call.1} parent=1 // pred_check
      _
    $region23: #{tpu_custom_call.1} parent=1 // pred_check_branch
      %42 = sbr.rel (0) target = $region25
    $region24: #{tpu_custom_call.1} parent=1 // pred_region
      _
    $region25: #{tpu_custom_call.1} parent=1 // pred_fallthru
      _
    // Predicated region
    $region26: #{tpu_custom_call.1} parent=1 // pred_check
      _
    $region27: #{tpu_custom_call.1} parent=1 // pred_check_branch
      %44 = sbr.rel (0) target = $region29
    $region28: #{tpu_custom_call.1} parent=1 // pred_region
      _
    $region29: #{tpu_custom_call.1} parent=1 // pred_fallthru
      _
    // Predicated region
    $region30: #{tpu_custom_call.1} parent=1 // pred_check
      _
    $region31: #{tpu_custom_call.1} parent=1 // pred_check_branch
      %46 = sbr.rel (0) target = $region33
    $region32: #{tpu_custom_call.1} parent=1 // pred_region
      %47 = dma.done [#allocation3], 32
    $region33: #{tpu_custom_call.1} parent=1 // pred_fallthru
      _
    // Predicated region
    $region34: #{tpu_custom_call.1} parent=1 // pred_check
      _
    $region35: #{tpu_custom_call.1} parent=1 // pred_check_branch
      %49 = sbr.rel (0) target = $region37
    $region36: #{tpu_custom_call.1} parent=1 // pred_region
      %50 = dma.done [#allocation6], 16
    $region37: #{tpu_custom_call.1} parent=1 // pred_fallthru
      _
    %v51 = vld [vmem:[#allocation2] sm:$0x3]
    %v52 = vld [vmem:[%s1] sm:$0xff]
    %v53 = vld [vmem:[%s2] sm:$0x1]
    %v55 = vlaneseq
    %v56 = vshrl.u32 %v55, 7
    %v57 = vsub.s32 0, %v56
    %v58 = vrot.slane %v53, %v57
    %vm60 = vcmask 64512
    %v62 = vsel %vm60, %v51, 0
    %64 = vmatprep.subr.mxu0 0.0
    %65 = vmatpush1.msra.mxu0 0.0
    %66 = vmatprep.subr.mxu0 0.0
    %67 = vmatpush1.msra.mxu0 0.0
    %68 = vmatprep.subr.mxu0 0.0
    %69 = vmatpush1.msra.mxu0 0.0
    %70 = vmatprep.subr.mxu0 0.0
    %71 = vmatpush1.msra.mxu0 0.0
    %72 = vmatprep.subr.mxu0 0.0
    %73 = vmatpush1.msra.mxu0 0.0
    %74 = vmatprep.subr.mxu0 0.0
    %75 = vmatpush1.msra.mxu0 0.0
    %76 = vmatprep.subr.mxu0 0.0
    %77 = vmatpush1.msra.mxu0 0.0
    %78 = vmatprep.subr.mxu0 0.0
    %79 = vmatpush1.msra.mxu0 0.0
    %80 = vmatprep.subr.mxu0 0.0
    %81 = vmatpush1.msra.mxu0 0.0
    %82 = vmatprep.subr.mxu0 0.0
    %83 = vmatpush1.msra.mxu0 0.0
    %84 = vmatprep.subr.mxu0 0.0
    %85 = vmatpush1.msra.mxu0 0.0
    %86 = vmatprep.subr.mxu0 0.0
    %87 = vmatpush1.msra.mxu0 0.0
    %88 = vmatprep.subr.mxu0 0.0
    %89 = vmatpush1.msra.mxu0 0.0
    %90 = vmatprep.subr.mxu0 0.0
    %91 = vmatpush1.msra.mxu0 0.0
    %92 = vmatprep.subr.mxu0 0.0
    %93 = vmatpush1.msra.mxu0 0.0
    %94 = vmatprep.subr.mxu0 0.0
    %95 = vmatpush1.msra.mxu0 %v52
    %96 = vmatprep.subr.mxu0 0.0
    %97 = vmatpush2.msra.mxu0 0.0
    %98 = vmatprep.subr.mxu0 0.0
    %99 = vmatpush2.msra.mxu0 0.0
    %100 = vmatprep.subr.mxu0 0.0
    %101 = vmatpush2.msra.mxu0 0.0
    %102 = vmatprep.subr.mxu0 0.0
    %103 = vmatpush2.msra.mxu0 0.0
    %104 = vmatprep.subr.mxu0 0.0
    %105 = vmatpush2.msra.mxu0 0.0
    %106 = vmatprep.subr.mxu0 0.0
    %107 = vmatpush2.msra.mxu0 0.0
    %108 = vmatprep.subr.mxu0 0.0
    %109 = vmatpush2.msra.mxu0 0.0
    %110 = vmatprep.subr.mxu0 0.0
    %111 = vmatpush2.msra.mxu0 0.0
    %112 = vmatprep.subr.mxu0 0.0
    %113 = vmatpush2.msra.mxu0 0.0
    %114 = vmatprep.subr.mxu0 0.0
    %115 = vmatpush2.msra.mxu0 0.0
    %116 = vmatprep.subr.mxu0 0.0
    %117 = vmatpush2.msra.mxu0 0.0
    %118 = vmatprep.subr.mxu0 0.0
    %119 = vmatpush2.msra.mxu0 0.0
    %120 = vmatprep.subr.mxu0 0.0
    %121 = vmatpush2.msra.mxu0 0.0
    %122 = vmatprep.subr.mxu0 0.0
    %123 = vmatpush2.msra.mxu0 0.0
    %124 = vmatprep.subr.mxu0 0.0
    %125 = vmatpush2.msra.mxu0 0.0
    %126 = vmatprep.subr.mxu0 0.0
    %127 = vmatpush2.msra.mxu0 0.0
    %128 = vmatprep.mubr.f32.mxu0 0.0
    %129 = vmatmul.mubr.f32.gmra.mxu0 %v62
    %v130 = vpop.f32.mrf.mxu0
    %v131 = vadd.f32 %v58, %v130
    %v132 = vpop.f32.mrf.mxu0
    %133 = vdwg.mxu0
    %v134 = vtanh.pop %v131
    %v135 = vld [vmem:[%s3] sm:$0xff]
    %v136 = vld [vmem:[%s3 + $0x8] sm:$0xff]
    %v137 = vld [vmem:[%s3 + $0x10] sm:$0xff]
    %v138 = vld [vmem:[%s3 + $0x18] sm:$0xff]
    %v139 = vld [vmem:[#allocation5] sm:$0x1]
    %v141 = vlaneseq
    %v142 = vshrl.u32 %v141, 7
    %v143 = vsub.s32 0, %v142
    %v144 = vrot.slane %v139, %v143
    %vm146 = vcmask 261120
    %v148 = vsel %vm146, %v134, 0
    %150 = vmatprep.subr.mxu0 0.0
    %151 = vmatpush1.msra.mxu0 0.0
    %152 = vmatprep.subr.mxu0 0.0
    %153 = vmatpush1.msra.mxu0 0.0
    %154 = vmatprep.subr.mxu0 0.0
    %155 = vmatpush1.msra.mxu0 0.0
    %156 = vmatprep.subr.mxu0 0.0
    %157 = vmatpush1.msra.mxu0 0.0
    %158 = vmatprep.subr.mxu0 0.0
    %159 = vmatpush1.msra.mxu0 0.0
    %160 = vmatprep.subr.mxu0 0.0
    %161 = vmatpush1.msra.mxu0 0.0
    %162 = vmatprep.subr.mxu0 0.0
    %163 = vmatpush1.msra.mxu0 0.0
    %164 = vmatprep.subr.mxu0 0.0
    %165 = vmatpush1.msra.mxu0 0.0
    %166 = vmatprep.subr.mxu0 0.0
    %167 = vmatpush1.msra.mxu0 0.0
    %168 = vmatprep.subr.mxu0 0.0
    %169 = vmatpush1.msra.mxu0 0.0
    %170 = vmatprep.subr.mxu0 0.0
    %171 = vmatpush1.msra.mxu0 0.0
    %172 = vmatprep.subr.mxu0 0.0
    %173 = vmatpush1.msra.mxu0 0.0
    %174 = vmatprep.subr.mxu0 0.0
    %175 = vmatpush1.msra.mxu0 %v138
    %176 = vmatprep.subr.mxu0 0.0
    %177 = vmatpush1.msra.mxu0 %v137
    %178 = vmatprep.subr.mxu0 0.0
    %179 = vmatpush1.msra.mxu0 %v136
    %180 = vmatprep.subr.mxu0 0.0
    %181 = vmatpush1.msra.mxu0 %v135
    %182 = vmatprep.subr.mxu0 0.0
    %183 = vmatpush2.msra.mxu0 0.0
    %184 = vmatprep.subr.mxu0 0.0
    %185 = vmatpush2.msra.mxu0 0.0
    %186 = vmatprep.subr.mxu0 0.0
    %187 = vmatpush2.msra.mxu0 0.0
    %188 = vmatprep.subr.mxu0 0.0
    %189 = vmatpush2.msra.mxu0 0.0
    %190 = vmatprep.subr.mxu0 0.0
    %191 = vmatpush2.msra.mxu0 0.0
    %192 = vmatprep.subr.mxu0 0.0
    %193 = vmatpush2.msra.mxu0 0.0
    %194 = vmatprep.subr.mxu0 0.0
    %195 = vmatpush2.msra.mxu0 0.0
    %196 = vmatprep.subr.mxu0 0.0
    %197 = vmatpush2.msra.mxu0 0.0
    %198 = vmatprep.subr.mxu0 0.0
    %199 = vmatpush2.msra.mxu0 0.0
    %200 = vmatprep.subr.mxu0 0.0
    %201 = vmatpush2.msra.mxu0 0.0
    %202 = vmatprep.subr.mxu0 0.0
    %203 = vmatpush2.msra.mxu0 0.0
    %204 = vmatprep.subr.mxu0 0.0
    %205 = vmatpush2.msra.mxu0 0.0
    %206 = vmatprep.subr.mxu0 0.0
    %207 = vmatpush2.msra.mxu0 0.0
    %208 = vmatprep.subr.mxu0 0.0
    %209 = vmatpush2.msra.mxu0 0.0
    %210 = vmatprep.subr.mxu0 0.0
    %211 = vmatpush2.msra.mxu0 0.0
    %212 = vmatprep.subr.mxu0 0.0
    %213 = vmatpush2.msra.mxu0 0.0
    %214 = vmatprep.mubr.f32.mxu0 0.0
    %215 = vmatmul.mubr.f32.gmra.mxu0 %v148
    %v216 = vpop.f32.mrf.mxu0
    %v217 = vadd.f32 %v144, %v216
    %v218 = vpop.f32.mrf.mxu0
    %219 = vdwg.mxu0
    %v220 = vtanh.pop %v217
    %v221 = vld [vmem:[%s5] sm:$0xff]
    %v222 = vld [vmem:[%s5 + $0x8] sm:$0xff]
    %v223 = vld [vmem:[%s5 + $0x10] sm:$0xff]
    %v224 = vld [vmem:[%s5 + $0x18] sm:$0xff]
    %v225 = vld [vmem:[%s6] sm:$0x1]
    %v227 = vlaneseq
    %v228 = vshrl.u32 %v227, 7
    %v229 = vsub.s32 0, %v228
    %v230 = vrot.slane %v225, %v229
    %v233 = vsel %vm146, %v220, 0
    %235 = vmatprep.subr.mxu0 0.0
    %236 = vmatpush1.msra.mxu0 0.0
    %237 = vmatprep.subr.mxu0 0.0
    %238 = vmatpush1.msra.mxu0 0.0
    %239 = vmatprep.subr.mxu0 0.0
    %240 = vmatpush1.msra.mxu0 0.0
    %241 = vmatprep.subr.mxu0 0.0
    %242 = vmatpush1.msra.mxu0 0.0
    %243 = vmatprep.subr.mxu0 0.0
    %244 = vmatpush1.msra.mxu0 0.0
    %245 = vmatprep.subr.mxu0 0.0
    %246 = vmatpush1.msra.mxu0 0.0
    %247 = vmatprep.subr.mxu0 0.0
    %248 = vmatpush1.msra.mxu0 0.0
    %249 = vmatprep.subr.mxu0 0.0
    %250 = vmatpush1.msra.mxu0 0.0
    %251 = vmatprep.subr.mxu0 0.0
    %252 = vmatpush1.msra.mxu0 0.0
    %253 = vmatprep.subr.mxu0 0.0
    %254 = vmatpush1.msra.mxu0 0.0
    %255 = vmatprep.subr.mxu0 0.0
    %256 = vmatpush1.msra.mxu0 0.0
    %257 = vmatprep.subr.mxu0 0.0
    %258 = vmatpush1.msra.mxu0 0.0
    %259 = vmatprep.subr.mxu0 0.0
    %260 = vmatpush1.msra.mxu0 %v224
    %261 = vmatprep.subr.mxu0 0.0
    %262 = vmatpush1.msra.mxu0 %v223
    %263 = vmatprep.subr.mxu0 0.0
    %264 = vmatpush1.msra.mxu0 %v222
    %265 = vmatprep.subr.mxu0 0.0
    %266 = vmatpush1.msra.mxu0 %v221
    %267 = vmatprep.subr.mxu0 0.0
    %268 = vmatpush2.msra.mxu0 0.0
    %269 = vmatprep.subr.mxu0 0.0
    %270 = vmatpush2.msra.mxu0 0.0
    %271 = vmatprep.subr.mxu0 0.0
    %272 = vmatpush2.msra.mxu0 0.0
    %273 = vmatprep.subr.mxu0 0.0
    %274 = vmatpush2.msra.mxu0 0.0
    %275 = vmatprep.subr.mxu0 0.0
    %276 = vmatpush2.msra.mxu0 0.0
    %277 = vmatprep.subr.mxu0 0.0
    %278 = vmatpush2.msra.mxu0 0.0
    %279 = vmatprep.subr.mxu0 0.0
    %280 = vmatpush2.msra.mxu0 0.0
    %281 = vmatprep.subr.mxu0 0.0
    %282 = vmatpush2.msra.mxu0 0.0
    %283 = vmatprep.subr.mxu0 0.0
    %284 = vmatpush2.msra.mxu0 0.0
    %285 = vmatprep.subr.mxu0 0.0
    %286 = vmatpush2.msra.mxu0 0.0
    %287 = vmatprep.subr.mxu0 0.0
    %288 = vmatpush2.msra.mxu0 0.0
    %289 = vmatprep.subr.mxu0 0.0
    %290 = vmatpush2.msra.mxu0 0.0
    %291 = vmatprep.subr.mxu0 0.0
    %292 = vmatpush2.msra.mxu0 0.0
    %293 = vmatprep.subr.mxu0 0.0
    %294 = vmatpush2.msra.mxu0 0.0
    %295 = vmatprep.subr.mxu0 0.0
    %296 = vmatpush2.msra.mxu0 0.0
    %297 = vmatprep.subr.mxu0 0.0
    %298 = vmatpush2.msra.mxu0 0.0
    %299 = vmatprep.mubr.f32.mxu0 0.0
    %300 = vmatmul.mubr.f32.gmra.mxu0 %v233
    %v301 = vpop.f32.mrf.mxu0
    %v302 = vadd.f32 %v230, %v301
    %v303 = vpop.f32.mrf.mxu0
    %304 = vdwg.mxu0
    %v305 = vxor.u32 %v302, 2147483648
    %v306 = vmul.f32 %v305, 1.442695
    %v307 = vpow.pop %v306
    %v308 = vadd.f32 %v307, 1.0
    %v309 = vrcp.pop %v308
    %v310 = vmul.f32 1.0, %v309
    %vm311 = vcmask 25600
    %312 = vst.msk [vmem:[#allocation7] sm:$0x3] %vm311, %v310
    // Predicated region
    $region38: #{tpu_custom_call.1} parent=1 // pred_check
      _
    $region39: #{tpu_custom_call.1} parent=1 // pred_check_branch
      %314 = sbr.rel (0) target = $region41
    $region40: #{tpu_custom_call.1} parent=1 // pred_region
      %s316 = ssub.s32 32, 32
      %317 = vsyncadd [#allocation4], %s316
      %s319 = sshll.u32 [#allocation7], 4
      %s320 = int_to_ptr.vmem [resolvable:$true] %s319
      %322 = dma.vmem_to_hbm [thread:$0]  %s320, 32, %s7, [#allocation4]
    $region41: #{tpu_custom_call.1} parent=1 // pred_fallthru
      _
    // Predicated region
    $region42: #{tpu_custom_call.1} parent=1 // pred_check
      _
    $region43: #{tpu_custom_call.1} parent=1 // pred_check_branch
      %324 = sbr.rel (0) target = $region45
    $region44: #{tpu_custom_call.1} parent=1 // pred_region
      %325 = dma.done [#allocation4], 32
    $region45: #{tpu_custom_call.1} parent=1 // pred_fallthru
      _
    %326 = vsyncpa [#allocation3], 1
    %327 = vsyncpa [#allocation6], 1
    %328 = vsyncpa [#allocation4], 1

</llo_original>
